<compile_context>
chip_gen: v6e
topology: v6e:2x2x1
jax: 0.10.0
libtpu: 0.0.40
codegen_flags: <defaults>
</compile_context>

<pallas_src>
import math

import jax
import jax.numpy as jnp
from jax.experimental import pallas as pl
from jax.experimental.pallas import tpu as pltpu

LANE = 128
SUBLANE = 8


def _round_up(x, m):
    return ((x + m - 1) // m) * m


def _largest_divisor_tile(n, target, mult):
    """Largest t <= target with t % mult == 0 and n % t == 0; n itself if small."""
    if n <= target:
        return n
    t = (min(target, n) // mult) * mult
    while t >= mult:
        if n % t == 0:
            return t
        t -= mult
    return n  # full-dim block is always legal


def _vmem_budget_bytes():
    """Per-generation scoped-VMEM budget (~48 MiB on v7x, ~96 MiB on v5e/v6e)."""
    try:
        phys = pltpu.get_tpu_info().vmem_capacity_bytes
    except Exception:  # not queryable -> assume the smallest (v7x-like) VMEM
        phys = 64 << 20
    return int(min(0.75 * phys, 100 << 20))


def _plan_stage2(n_pad, out_pad, adj_itemsize, h_itemsize, budget):
    """Pick (tm, tk, h_resident, vmem_limit) for the adj @ h sweep."""
    # Budget resident h at 2 copies in case the single-buffer request is
    # unavailable and Pallas falls back to default double-buffering.
    h_res_bytes = 2 * n_pad * out_pad * h_itemsize
    h_resident = h_res_bytes <= budget // 2

    def working_set(tm, tk):
        h_bytes = h_res_bytes if h_resident else 2 * tk * out_pad * h_itemsize
        return (h_bytes
                + 2 * tm * tk * adj_itemsize   # double-buffered adj tile
                + 2 * tm * out_pad * 4)        # double-buffered f32 out tile

    # Prefer large adj tiles so the per-step DMA dwarfs the ~0.35 us grid-step
    # overhead; shrink until the working set fits the budget.
    for tk_t, tm_t in ((2048, 1024), (1024, 1024), (1024, 512), (512, 512),
                       (512, 256), (256, 256), (256, 128), (128, 64), (128, 8)):
        tk = _largest_divisor_tile(n_pad, tk_t, LANE)
        tm = _largest_divisor_tile(n_pad, tm_t, SUBLANE)
        ws = working_set(tm, tk)
        if ws <= budget:
            vmem_limit = min(budget, max(int(1.3 * ws), 16 << 20))
            return tm, tk, h_resident, vmem_limit

    # Degenerate fallback: minimal legal tiles, no resident h.
    return (_largest_divisor_tile(n_pad, 8, SUBLANE),
            _largest_divisor_tile(n_pad, LANE, LANE),
            False, budget)


# ---------------------------------------------------------------------------
# Stage 1: h = feat @ weight   (small matmul, tiled over rows only)
# ---------------------------------------------------------------------------
def _feat_weight_kernel(feat_ref, w_ref, h_ref):
    h_ref[...] = jnp.dot(
        feat_ref[...], w_ref[...], preferred_element_type=jnp.float32
    ).astype(h_ref.dtype)


def _feat_weight_matmul(feat, weight, out_dtype):
    n, in_feat = feat.shape
    out_pad = weight.shape[1]
    tm = _largest_divisor_tile(n, 512, SUBLANE)
    return pl.pallas_call(
        _feat_weight_kernel,
        out_shape=jax.ShapeDtypeStruct((n, out_pad), out_dtype),
        grid=(n // tm,),
        in_specs=[
            pl.BlockSpec((tm, in_feat), lambda i: (i, 0)),
            pl.BlockSpec((in_feat, out_pad), lambda i: (0, 0)),
        ],
        out_specs=pl.BlockSpec((tm, out_pad), lambda i: (i, 0)),
        compiler_params=pltpu.CompilerParams(
            dimension_semantics=("parallel",),
        ),
        cost_estimate=pl.CostEstimate(
            flops=2 * n * in_feat * out_pad,
            bytes_accessed=(feat.dtype.itemsize * n * in_feat
                            + weight.dtype.itemsize * in_feat * out_pad
                            + jnp.dtype(out_dtype).itemsize * n * out_pad),
            transcendentals=0,
        ),
    )(feat, weight)


# ---------------------------------------------------------------------------
# Stage 2: out = adj @ h   (tiled over (rows, k); accumulate into out block)
# ---------------------------------------------------------------------------
def _make_adj_spmm_kernel(tk, h_resident):
    def kernel(adj_ref, h_ref, out_ref):
        k = pl.program_id(1)

        @pl.when(k == 0)
        def _():
            out_ref[...] = jnp.zeros_like(out_ref)

        if h_resident:
            # h lives fully in VMEM: slice the current k panel out of it.
            off = pl.multiple_of(k * tk, tk)
            h_blk = h_ref[pl.ds(off, tk), :]
        else:
            h_blk = h_ref[...]

        # out block index is constant across k -> accumulate directly into the
        # resident f32 output block (no separate acc scratch / final copy).
        out_ref[...] += jnp.dot(
            adj_ref[...], h_blk, preferred_element_type=jnp.float32
        )

    return kernel


def _adj_spmm(adj, h, tm, tk, h_resident, vmem_limit, single_buffer_h=True):
    n = adj.shape[0]
    out_pad = h.shape[1]
    adj_isz = adj.dtype.itemsize
    h_isz = h.dtype.itemsize

    if h_resident:
        spec_kwargs = {}
        if single_buffer_h:
            spec_kwargs["pipeline_mode"] = pl.Buffered(1)  # one copy, DMA'd once
        h_spec = pl.BlockSpec((n, out_pad), lambda i, k: (0, 0), **spec_kwargs)
        h_bytes_read = n * out_pad * h_isz
    else:
        h_spec = pl.BlockSpec((tk, out_pad), lambda i, k: (k, 0))
        h_bytes_read = (n // tm) * n * out_pad * h_isz

    return pl.pallas_call(
        _make_adj_spmm_kernel(tk, h_resident),
        out_shape=jax.ShapeDtypeStruct((n, out_pad), jnp.float32),
        grid=(n // tm, n // tk),
        in_specs=[
            pl.BlockSpec((tm, tk), lambda i, k: (i, k)),
            h_spec,
        ],
        out_specs=pl.BlockSpec((tm, out_pad), lambda i, k: (i, 0)),
        compiler_params=pltpu.CompilerParams(
            # TODO(synk): on v7x, consider pltpu.CORE_PARALLEL on the row axis
            # if plain "parallel" does not split the grid across the two TCs.
            dimension_semantics=("parallel", "arbitrary"),
            vmem_limit_bytes=int(vmem_limit),
        ),
        cost_estimate=pl.CostEstimate(
            flops=2 * n * n * out_pad,
            bytes_accessed=adj_isz * n * n + h_bytes_read + 4 * n * out_pad,
            transcendentals=0,
        ),
    )(adj, h)


# ---------------------------------------------------------------------------
# Wrapper
# ---------------------------------------------------------------------------
def decoder_forward(feat, adj, weight):
    """Pallas implementation of Decoder.forward(feat, adj)."""
    n, in_feat = feat.shape
    in_feat_w, out_feat = weight.shape
    assert in_feat == in_feat_w
    assert adj.shape == (n, n)

    # Lane-dense output feature dim: exactly 128 for out_feat <= 128.
    out_pad = _round_up(max(out_feat, 1), LANE)

    # Pad granularity is decoupled from the k tile (256, not tk), so
    # tile-friendly N never pays the O(N^2) jnp.pad copy of adj.
    pad_base = 256 if n >= 256 else SUBLANE
    n_pad = _round_up(n, pad_base)

    # Never down-cast a f32 adj in the wrapper (that adds HBM traffic); only
    # follow adj's dtype if it already arrives in bf16.
    compute_dtype = adj.dtype if adj.dtype == jnp.bfloat16 else jnp.float32
    # TODO(synk): if adj is a static normalized adjacency reused across calls,
    # store it quantized upstream (fp8 on v7x, int8 on v5e/v6e); not done here.
    # TODO(synk): a genuinely sparse adj (CSR spmm) has no direct dense-tile
    # Pallas equivalent here; adj is treated as dense.

    itemsize = jnp.dtype(compute_dtype).itemsize
    budget = _vmem_budget_bytes()
    tm, tk, h_resident, vmem_limit = _plan_stage2(
        n_pad, out_pad, itemsize, itemsize, budget)

    feat_p = feat if n_pad == n else jnp.pad(feat, ((0, n_pad - n), (0, 0)))
    w_p = weight if out_pad == out_feat else jnp.pad(
        weight, ((0, 0), (0, out_pad - out_feat)))
    adj_p = adj
    if n_pad != n:
        # O(N^2) copy -- only paid when N is not a multiple of the pad base.
        adj_p = jnp.pad(adj, ((0, n_pad - n), (0, n_pad - n)))
    if adj_p.dtype != compute_dtype:
        adj_p = adj_p.astype(compute_dtype)  # no-op for f32 / bf16 adj

    # Stage 1 (cheap, hoisted out of the O(N^2) sweep): h = feat @ weight,
    # emitted directly in the stage-2 compute dtype.
    h = _feat_weight_matmul(feat_p, w_p, compute_dtype)

    # Stage 2 (dominant): out = adj @ h with VMEM-resident h when it fits.
    try:
        out_p = _adj_spmm(adj_p, h, tm, tk, h_resident, vmem_limit,
                          single_buffer_h=True)
    except Exception:
        # Fallback for jax versions without BlockSpec pipeline_mode support;
        # the constant h block index still means h is DMA'd only once.
        out_p = _adj_spmm(adj_p, h, tm, tk, h_resident, vmem_limit,
                          single_buffer_h=False)

    return out_p[:n, :out_feat].astype(feat.dtype)


def xavier_uniform(key, shape, dtype=jnp.float32):
    # Matches torch.nn.init.xavier_uniform_ for a 2-D weight (gain=1).
    fan_in, fan_out = shape
    bound = math.sqrt(6.0 / (fan_in + fan_out))
    return jax.random.uniform(key, shape, dtype, minval=-bound, maxval=bound)


if __name__ == "__main__":
    # Small shapes consistent with the module: N nodes, in_feat -> out_feat.
    N, IN_FEAT, OUT_FEAT = 8, 32, 16

    key = jax.random.PRNGKey(0)
    k_feat, k_adj, k_w = jax.random.split(key, 3)

    feat = jax.random.normal(k_feat, (N, IN_FEAT), dtype=jnp.float32)
    adj = jax.random.uniform(k_adj, (N, N), dtype=jnp.float32)
    weight = xavier_uniform(k_w, (IN_FEAT, OUT_FEAT))

    out = decoder_forward(feat, adj, weight)
    out = jax.block_until_ready(out)

    # Correctness check against plain-JAX reference.
    ref = adj @ (feat @ weight)
    assert out.shape == (N, OUT_FEAT)
    assert jnp.allclose(out, ref, atol=1e-4, rtol=1e-4), "mismatch vs reference"

    print("KERNEL_OK")
</pallas_src>

<mosaic_0001>
module attributes {stable_mosaic.version = 11 : i64} {
  func.func @_feat_weight_kernel(%arg0: i32, %arg1: memref<8x32xf32, #tpu.memory_space<vmem>>, %arg2: memref<32x128xf32, #tpu.memory_space<vmem>>, %arg3: memref<8x128xf32, #tpu.memory_space<vmem>>) attributes {dimension_semantics = [#tpu.dimension_semantics<parallel>], iteration_bounds = array<i64: 1>, scalar_prefetch = 0 : i64, scratch_operands = 0 : i64, tpu.core_type = #tpu.core_type<tc>, window_params = [{transform_indices = @transform_0, window_bounds = array<i64: 8, 32>}, {pipeline_mode = #tpu.pipeline_mode<synchronous>, transform_indices = @transform_1, window_bounds = array<i64: 32, 128>}, {transform_indices = @transform_2, window_bounds = array<i64: 8, 128>}]} {
    %c0 = arith.constant 0 : index
    %c0_0 = arith.constant 0 : index
    %0 = vector.load %arg1[%c0, %c0_0] : memref<8x32xf32, #tpu.memory_space<vmem>>, vector<8x32xf32>
    %c0_1 = arith.constant 0 : index
    %c0_2 = arith.constant 0 : index
    %1 = vector.load %arg2[%c0_1, %c0_2] : memref<32x128xf32, #tpu.memory_space<vmem>>, vector<32x128xf32>
    %cst = arith.constant dense<0.000000e+00> : vector<8x128xf32>
    %2 = tpu.matmul %0, %1, %cst {dimension_numbers = #tpu.dot_dimension_numbers<[1], [0], [0], [1], [0, 0, 1, 1], [], []>} : vector<8x32xf32>, vector<32x128xf32>, vector<8x128xf32> -> vector<8x128xf32>
    %c0_3 = arith.constant 0 : index
    %c0_4 = arith.constant 0 : index
    %3 = vector.load %arg3[%c0_3, %c0_4] : memref<8x128xf32, #tpu.memory_space<vmem>>, vector<8x128xf32>
    tpu.vector_store %arg3[%c0_3, %c0_4], %2 {strides = array<i32>} : memref<8x128xf32, #tpu.memory_space<vmem>>, vector<8x128xf32>,
    return
  }
  func.func @transform_0(%arg0: i32) -> (i32, i32) {
    %c0_i32 = arith.constant 0 : i32
    %c0_i32_0 = arith.constant 0 : i32
    return %arg0, %c0_i32 : i32, i32
  }
  func.func @transform_1(%arg0: i32) -> (i32, i32) {
    %c0_i32 = arith.constant 0 : i32
    %c0_i32_0 = arith.constant 0 : i32
    %c0_i32_1 = arith.constant 0 : i32
    return %c0_i32, %c0_i32_0 : i32, i32
  }
  func.func @transform_2(%arg0: i32) -> (i32, i32) {
    %c0_i32 = arith.constant 0 : i32
    %c0_i32_0 = arith.constant 0 : i32
    return %arg0, %c0_i32 : i32, i32
  }
}

</mosaic_0001>

<llo_original>
// kernel: tpu_custom_call.1
$region0: #{tpu_custom_call.1}
  #allocation0 [shape = 'u32[]', space=smem, size = 0x4, offset = 0x4, fixed_abs, tag = 'smem constant byte address 0x4 - core index']
  #allocation1 [shape = 'u32[144,128]{1,0:T(1,128)}', space=vmem, size = 0x12000, scoped, tag = 'internal scratch']
  %s0 = inlined_call_operand.hbm [shape: f32[8,32], index: 0, kind: input, shape index: {}]
  %s1 = inlined_call_operand.hbm [shape: f32[32,128], index: 1, kind: input, shape index: {}]
  %s2 = inlined_call_operand.hbm [shape: f32[8,128], index: 2, kind: output, shape index: {}]
  %s3 = sld [smem:[#allocation0]]
  $region26: #{tpu_custom_call.1} parent=0
    _
  %s5 = ssub.s32 1, %s3
  %s6 = scalar_select 0, %s5, %s3
  $region1: #{tpu_custom_call.1} parent=0
    #allocation2 [shape = 'u8[4096]{0}', space=vmem, size = 0x1000, scoped, tag = 'input window, operand 0, single buffered']
    #allocation3 [shape = 's32[1]{0}', space=sflag, size = 0x4, scoped, tag = 'scoped memory for tpu_custom_call.1']
    #allocation4 [shape = 's32[1]{0}', space=sflag, size = 0x4, scoped, tag = 'scoped memory for tpu_custom_call.1']
    #allocation5 [shape = 'u8[16384]{0}', space=vmem, size = 0x4000, scoped, tag = 'input window, operand 1, single buffered']
    #allocation6 [shape = 's32[1]{0}', space=sflag, size = 0x4, scoped, tag = 'scoped memory for tpu_custom_call.1']
    #allocation7 [shape = 'u8[4096]{0}', space=vmem, size = 0x1000, scoped, tag = 'output window, operand 0, single buffered']
    %7 = vsyncpa [#allocation3], 0
    %8 = vsyncpa [#allocation6], 0
    %9 = vsyncpa [#allocation4], 0
    // Predicated region
    $region2: #{tpu_custom_call.1} parent=1 // pred_check
      _
    $region3: #{tpu_custom_call.1} parent=1 // pred_check_branch
      %11 = sbr.rel (0) target = $region5
    $region4: #{tpu_custom_call.1} parent=1 // pred_region
      %s13 = ssub.s32 128, 128
      %14 = vsyncadd [#allocation3], %s13
      %s16 = sshll.u32 [#allocation2], 4
      %s17 = int_to_ptr.vmem [resolvable:$true] %s16
      %19 = dma.hbm_to_vmem [thread:$0]  %s0, 128, %s17, [#allocation3]
    $region5: #{tpu_custom_call.1} parent=1 // pred_fallthru
      _
    // Predicated region
    $region6: #{tpu_custom_call.1} parent=1 // pred_check
      _
    $region7: #{tpu_custom_call.1} parent=1 // pred_check_branch
      %21 = sbr.rel (0) target = $region9
    $region8: #{tpu_custom_call.1} parent=1 // pred_region
      %s23 = ssub.s32 512, 512
      %24 = vsyncadd [#allocation6], %s23
      %s25 = sshll.u32 [#allocation5], 4
      %s26 = int_to_ptr.vmem [resolvable:$true] %s25
      %31 = dma.hbm_to_vmem [thread:$0]  %s1, 512, %s26, [#allocation6], 128, 128, 8
    $region9: #{tpu_custom_call.1} parent=1 // pred_fallthru
      _
    // Predicated region
    $region10: #{tpu_custom_call.1} parent=1 // pred_check
      _
    $region11: #{tpu_custom_call.1} parent=1 // pred_check_branch
      %33 = sbr.rel (0) target = $region13
    $region12: #{tpu_custom_call.1} parent=1 // pred_region
      %34 = dma.done [#allocation3], 128
    $region13: #{tpu_custom_call.1} parent=1 // pred_fallthru
      _
    // Predicated region
    $region14: #{tpu_custom_call.1} parent=1 // pred_check
      _
    $region15: #{tpu_custom_call.1} parent=1 // pred_check_branch
      %36 = sbr.rel (0) target = $region17
    $region16: #{tpu_custom_call.1} parent=1 // pred_region
      %37 = dma.done [#allocation6], 512
    $region17: #{tpu_custom_call.1} parent=1 // pred_fallthru
      _
    %v38 = vld [vmem:[#allocation2] sm:$0xff]
    %v39 = vld [vmem:[#allocation5] sm:$0xff]
    %v40 = vld [vmem:[#allocation5 + $0x8] sm:$0xff]
    %v41 = vld [vmem:[#allocation5 + $0x10] sm:$0xff]
    %v42 = vld [vmem:[#allocation5 + $0x18] sm:$0xff]
    %vm43 = vcmask 261120
    %v45 = vsel %vm43, %v38, 0
    %47 = vmatprep.subr.mxu0 0.0
    %48 = vmatpush1.msra.mxu0 0.0
    %49 = vmatprep.subr.mxu0 0.0
    %50 = vmatpush1.msra.mxu0 0.0
    %51 = vmatprep.subr.mxu0 0.0
    %52 = vmatpush1.msra.mxu0 0.0
    %53 = vmatprep.subr.mxu0 0.0
    %54 = vmatpush1.msra.mxu0 0.0
    %55 = vmatprep.subr.mxu0 0.0
    %56 = vmatpush1.msra.mxu0 0.0
    %57 = vmatprep.subr.mxu0 0.0
    %58 = vmatpush1.msra.mxu0 0.0
    %59 = vmatprep.subr.mxu0 0.0
    %60 = vmatpush1.msra.mxu0 0.0
    %61 = vmatprep.subr.mxu0 0.0
    %62 = vmatpush1.msra.mxu0 0.0
    %63 = vmatprep.subr.mxu0 0.0
    %64 = vmatpush1.msra.mxu0 0.0
    %65 = vmatprep.subr.mxu0 0.0
    %66 = vmatpush1.msra.mxu0 0.0
    %67 = vmatprep.subr.mxu0 0.0
    %68 = vmatpush1.msra.mxu0 0.0
    %69 = vmatprep.subr.mxu0 0.0
    %70 = vmatpush1.msra.mxu0 0.0
    %71 = vmatprep.subr.mxu0 0.0
    %72 = vmatpush1.msra.mxu0 %v42
    %73 = vmatprep.subr.mxu0 0.0
    %74 = vmatpush1.msra.mxu0 %v41
    %75 = vmatprep.subr.mxu0 0.0
    %76 = vmatpush1.msra.mxu0 %v40
    %77 = vmatprep.subr.mxu0 0.0
    %78 = vmatpush1.msra.mxu0 %v39
    %79 = vmatprep.subr.mxu0 0.0
    %80 = vmatpush2.msra.mxu0 0.0
    %81 = vmatprep.subr.mxu0 0.0
    %82 = vmatpush2.msra.mxu0 0.0
    %83 = vmatprep.subr.mxu0 0.0
    %84 = vmatpush2.msra.mxu0 0.0
    %85 = vmatprep.subr.mxu0 0.0
    %86 = vmatpush2.msra.mxu0 0.0
    %87 = vmatprep.subr.mxu0 0.0
    %88 = vmatpush2.msra.mxu0 0.0
    %89 = vmatprep.subr.mxu0 0.0
    %90 = vmatpush2.msra.mxu0 0.0
    %91 = vmatprep.subr.mxu0 0.0
    %92 = vmatpush2.msra.mxu0 0.0
    %93 = vmatprep.subr.mxu0 0.0
    %94 = vmatpush2.msra.mxu0 0.0
    %95 = vmatprep.subr.mxu0 0.0
    %96 = vmatpush2.msra.mxu0 0.0
    %97 = vmatprep.subr.mxu0 0.0
    %98 = vmatpush2.msra.mxu0 0.0
    %99 = vmatprep.subr.mxu0 0.0
    %100 = vmatpush2.msra.mxu0 0.0
    %101 = vmatprep.subr.mxu0 0.0
    %102 = vmatpush2.msra.mxu0 0.0
    %103 = vmatprep.subr.mxu0 0.0
    %104 = vmatpush2.msra.mxu0 0.0
    %105 = vmatprep.subr.mxu0 0.0
    %106 = vmatpush2.msra.mxu0 0.0
    %107 = vmatprep.subr.mxu0 0.0
    %108 = vmatpush2.msra.mxu0 0.0
    %109 = vmatprep.subr.mxu0 0.0
    %110 = vmatpush2.msra.mxu0 0.0
    %111 = vmatprep.mubr.f32.mxu0 0.0
    %112 = vmatmul.mubr.f32.gmra.mxu0 %v45
    %v113 = vpop.f32.mrf.mxu0
    %v114 = vadd.f32 0.0, %v113
    %v115 = vpop.f32.mrf.mxu0
    %116 = vdwg.mxu0
    %117 = vst [vmem:[#allocation7] sm:$0xff] %v114
    // Predicated region
    $region18: #{tpu_custom_call.1} parent=1 // pred_check
      _
    $region19: #{tpu_custom_call.1} parent=1 // pred_check_branch
      %119 = sbr.rel (0) target = $region21
    $region20: #{tpu_custom_call.1} parent=1 // pred_region
      %s121 = ssub.s32 128, 128
      %122 = vsyncadd [#allocation4], %s121
      %s124 = sshll.u32 [#allocation7], 4
      %s125 = int_to_ptr.vmem [resolvable:$true] %s124
      %127 = dma.vmem_to_hbm [thread:$0]  %s125, 128, %s2, [#allocation4]
    $region21: #{tpu_custom_call.1} parent=1 // pred_fallthru
      _
    // Predicated region
    $region22: #{tpu_custom_call.1} parent=1 // pred_check
      _
    $region23: #{tpu_custom_call.1} parent=1 // pred_check_branch
      %129 = sbr.rel (0) target = $region25
    $region24: #{tpu_custom_call.1} parent=1 // pred_region
      %130 = dma.done [#allocation4], 128
    $region25: #{tpu_custom_call.1} parent=1 // pred_fallthru
      _
    %131 = vsyncpa [#allocation3], 1
    %132 = vsyncpa [#allocation6], 1
    %133 = vsyncpa [#allocation4], 1

</llo_original>
